<compile_context>
chip_gen: v7x
topology: tpu7x:2x2x1
jax: 0.10.0
libtpu: 0.0.40
codegen_flags: <defaults>
</compile_context>

<pallas_src>
import jax
import jax.numpy as jnp
from jax.experimental import pallas as pl
from jax.experimental.pallas import tpu as pltpu

# ----------------------------- model dimensions -----------------------------
OUTPUT_DIM = 10     # target vocab
EMB_DIM = 16
HID_DIM = 32        # 4*HID_DIM == 128 -> gate block is exactly one lane-width
N_LAYERS = 2
V_PAD = 128         # lane-dense padded fc output width

_VMEM = pl.BlockSpec(memory_space=pltpu.MemorySpace.VMEM)


# ------------------------------- Pallas kernel -------------------------------
def _decoder_step_kernel(ids_ref, h_ref, c_ref,
                         embw0_ref, whh0_ref, b0_ref,
                         wih1_ref, whh1_ref, b1_ref,
                         fcw_ref, fcb_ref,
                         pred_ref, h_out_ref, c_out_ref):
    """Fused Decoder.forward (one time step, whole padded batch).

    ids:    [Bp, 1]  int32 token ids
    h, c:   [N_LAYERS, Bp, H] previous hidden / cell state
    embw0:  [V, 4H]  == embedding @ W_ih(layer0)   (gather fused into matmul)
    whh0:   [H, 4H]; b0: [1, 4H]
    wih1:   [H, 4H]; whh1: [H, 4H]; b1: [1, 4H]
    fcw:    [H, V_PAD]; fcb: [1, V_PAD]            (lane-dense padded projection)
    Gate order (PyTorch): i, f, g, o.
    """
    Bp = ids_ref.shape[0]
    V = embw0_ref.shape[0]
    H = HID_DIM

    ids = ids_ref[...]                                              # [Bp, 1]
    onehot = (jax.lax.broadcasted_iota(jnp.int32, (Bp, V), 1) == ids
              ).astype(jnp.float32)                                 # [Bp, V]

    def lstm_layer(layer, x_gates, whh_ref, b_ref):
        h = h_ref[layer]                                            # [Bp, H]
        c = c_ref[layer]
        gates = (x_gates
                 + jnp.dot(h, whh_ref[...], preferred_element_type=jnp.float32)
                 + b_ref[...])                                      # [Bp, 4H] = 128 lanes
        # Two full-vreg EUP ops instead of four partial-lane ones.
        sig = jax.nn.sigmoid(gates)
        th = jnp.tanh(gates)
        i = sig[:, 0 * H:1 * H]
        f = sig[:, 1 * H:2 * H]
        g = th[:, 2 * H:3 * H]
        o = sig[:, 3 * H:4 * H]
        c_new = f * c + i * g
        h_new = o * jnp.tanh(c_new)
        h_out_ref[layer] = h_new
        c_out_ref[layer] = c_new
        return h_new

    # Layer 0: embedding gather + input transform fused as one_hot @ (emb @ W_ih0).
    xg0 = jnp.dot(onehot, embw0_ref[...], preferred_element_type=jnp.float32)
    h0 = lstm_layer(0, xg0, whh0_ref, b0_ref)

    # Layer 1: input is layer-0 hidden state.
    xg1 = jnp.dot(h0, wih1_ref[...], preferred_element_type=jnp.float32)
    h1 = lstm_layer(1, xg1, whh1_ref, b1_ref)

    # fc_out projection, lane-dense [Bp, 128] store.
    pred_ref[...] = (jnp.dot(h1, fcw_ref[...], preferred_element_type=jnp.float32)
                     + fcb_ref[...])


# ------------------------------ python wrapper --------------------------------
@jax.jit
def decoder_forward(prep, inp, hidden, cell):
    """Mirrors Decoder.forward(input, hidden, cell)   (eval mode, dropout = identity).

    inp:    [B] int32 token ids
    hidden: [N_LAYERS, B, HID_DIM] float32
    cell:   [N_LAYERS, B, HID_DIM] float32
    returns (prediction [B, OUTPUT_DIM], hidden, cell)
    """
    B = inp.shape[0]
    Bp = max(8, ((B + 7) // 8) * 8)          # pad batch to f32 sublane multiple
    pad_b = Bp - B

    ids = jnp.pad(inp.astype(jnp.int32), (0, pad_b)).reshape(Bp, 1)
    h = jnp.pad(hidden.astype(jnp.float32), ((0, 0), (0, pad_b), (0, 0)))
    c = jnp.pad(cell.astype(jnp.float32), ((0, 0), (0, pad_b), (0, 0)))

    out_shape = (
        jax.ShapeDtypeStruct((Bp, V_PAD), jnp.float32),
        jax.ShapeDtypeStruct((N_LAYERS, Bp, HID_DIM), jnp.float32),
        jax.ShapeDtypeStruct((N_LAYERS, Bp, HID_DIM), jnp.float32),
    )
    pred_p, h_p, c_p = pl.pallas_call(
        _decoder_step_kernel,
        out_shape=out_shape,
        in_specs=[_VMEM] * 11,
        out_specs=(_VMEM, _VMEM, _VMEM),
    )(ids, h, c,
      prep["embw0"], prep["whh0"], prep["b0"],
      prep["wih1"], prep["whh1"], prep["b1"],
      prep["fcw"], prep["fcb"])

    prediction = pred_p[:B, :OUTPUT_DIM]
    return prediction, h_p[:, :B, :], c_p[:, :B, :]


# ------------------------- parameters (module-shaped) --------------------------
def init_params(key):
    """Synthetic parameters with the PyTorch module's shapes (weights stored transposed)."""
    ks = iter(jax.random.split(key, 16))
    s = 1.0 / jnp.sqrt(HID_DIM)
    u = lambda k, shape, sc: jax.random.uniform(k, shape, jnp.float32, -sc, sc)
    return {
        "embedding": u(next(ks), (OUTPUT_DIM, EMB_DIM), 1.0),
        "w_ih": [u(next(ks), (EMB_DIM, 4 * HID_DIM), s),     # layer 0 (transposed)
                 u(next(ks), (HID_DIM, 4 * HID_DIM), s)],    # layer 1 (transposed)
        "w_hh": [u(next(ks), (HID_DIM, 4 * HID_DIM), s),
                 u(next(ks), (HID_DIM, 4 * HID_DIM), s)],
        "bias": [u(next(ks), (1, 4 * HID_DIM), s) + u(next(ks), (1, 4 * HID_DIM), s),
                 u(next(ks), (1, 4 * HID_DIM), s) + u(next(ks), (1, 4 * HID_DIM), s)],
        "fc_w": u(next(ks), (HID_DIM, OUTPUT_DIM), s),       # transposed fc_out.weight
        "fc_b": u(next(ks), (1, OUTPUT_DIM), s),
    }


def prepare_params(params):
    """One-time packing for the fused kernel: fuse embedding with layer-0 W_ih and
    pad the fc projection to 128 output lanes (lane-dense stores)."""
    hp = jax.lax.Precision.HIGHEST
    embw0 = jnp.dot(params["embedding"], params["w_ih"][0], precision=hp)   # [V, 4H]
    fcw = jnp.zeros((HID_DIM, V_PAD), jnp.float32).at[:, :OUTPUT_DIM].set(params["fc_w"])
    fcb = jnp.zeros((1, V_PAD), jnp.float32).at[:, :OUTPUT_DIM].set(params["fc_b"])
    return {
        "embw0": embw0,
        "whh0": params["w_hh"][0], "b0": params["bias"][0],
        "wih1": params["w_ih"][1], "whh1": params["w_hh"][1], "b1": params["bias"][1],
        "fcw": fcw, "fcb": fcb,
    }


# ------------------------------ pure-JAX reference ------------------------------
def decoder_forward_ref(params, inp, hidden, cell):
    hp = jax.lax.Precision.HIGHEST
    x = jnp.take(params["embedding"], inp, axis=0)
    h_out, c_out = [], []
    for l in range(N_LAYERS):
        h, c = hidden[l], cell[l]
        gates = (jnp.dot(x, params["w_ih"][l], precision=hp)
                 + jnp.dot(h, params["w_hh"][l], precision=hp)
                 + params["bias"][l])
        H = HID_DIM
        i = jax.nn.sigmoid(gates[:, :H])
        f = jax.nn.sigmoid(gates[:, H:2 * H])
        g = jnp.tanh(gates[:, 2 * H:3 * H])
        o = jax.nn.sigmoid(gates[:, 3 * H:])
        c_new = f * c + i * g
        h_new = o * jnp.tanh(c_new)
        h_out.append(h_new)
        c_out.append(c_new)
        x = h_new
    pred = jnp.dot(x, params["fc_w"], precision=hp) + params["fc_b"]
    return pred, jnp.stack(h_out), jnp.stack(c_out)


# ------------------------------------ main --------------------------------------
if __name__ == "__main__":
    key = jax.random.PRNGKey(0)
    k_p, k_i, k_h, k_c = jax.random.split(key, 4)

    params = init_params(k_p)
    prep = prepare_params(params)

    B = 2
    inp = jax.random.randint(k_i, (B,), 0, OUTPUT_DIM, dtype=jnp.int32)
    hidden = jax.random.normal(k_h, (N_LAYERS, B, HID_DIM), jnp.float32)
    cell = jax.random.normal(k_c, (N_LAYERS, B, HID_DIM), jnp.float32)

    pred, h_new, c_new = decoder_forward(prep, inp, hidden, cell)
    pred, h_new, c_new = jax.block_until_ready((pred, h_new, c_new))

    assert pred.shape == (B, OUTPUT_DIM) and pred.dtype == jnp.float32
    assert h_new.shape == (N_LAYERS, B, HID_DIM)
    assert c_new.shape == (N_LAYERS, B, HID_DIM)
    assert bool(jnp.all(jnp.isfinite(pred)))

    # Correctness vs. a pure-JAX reference of the PyTorch Decoder forward.
    pred_r, h_r, c_r = decoder_forward_ref(params, inp, hidden, cell)
    assert bool(jnp.allclose(pred, pred_r, atol=1e-2, rtol=1e-2))
    assert bool(jnp.allclose(h_new, h_r, atol=1e-2, rtol=1e-2))
    assert bool(jnp.allclose(c_new, c_r, atol=1e-2, rtol=1e-2))

    print("KERNEL_OK")
</pallas_src>

<mosaic_0001>
module attributes {stable_mosaic.version = 11 : i64} {
  func.func @_decoder_step_kernel(%arg0: memref<8x1xi32, #tpu.memory_space<vmem>>, %arg1: memref<2x8x32xf32, #tpu.memory_space<vmem>>, %arg2: memref<2x8x32xf32, #tpu.memory_space<vmem>>, %arg3: memref<10x128xf32, #tpu.memory_space<vmem>>, %arg4: memref<32x128xf32, #tpu.memory_space<vmem>>, %arg5: memref<1x128xf32, #tpu.memory_space<vmem>>, %arg6: memref<32x128xf32, #tpu.memory_space<vmem>>, %arg7: memref<32x128xf32, #tpu.memory_space<vmem>>, %arg8: memref<1x128xf32, #tpu.memory_space<vmem>>, %arg9: memref<32x128xf32, #tpu.memory_space<vmem>>, %arg10: memref<1x128xf32, #tpu.memory_space<vmem>>, %arg11: memref<8x128xf32, #tpu.memory_space<vmem>>, %arg12: memref<2x8x32xf32, #tpu.memory_space<vmem>>, %arg13: memref<2x8x32xf32, #tpu.memory_space<vmem>>) attributes {dimension_semantics = [], scalar_prefetch = 0 : i64, scratch_operands = 0 : i64, tpu.core_type = #tpu.core_type<tc>} {
    %c0 = arith.constant 0 : index
    %c0_0 = arith.constant 0 : index
    %0 = vector.load %arg0[%c0, %c0_0] : memref<8x1xi32, #tpu.memory_space<vmem>>, vector<8x1xi32>
    %1 = tpu.iota {dimensions = array<i32: 1>} : vector<8x10xi32>
    %2 = vector.broadcast %0 : vector<8x1xi32> to vector<8x10xi32>
    %3 = arith.cmpi eq, %1, %2 : vector<8x10xi32>
    %4 = arith.extui %3 : vector<8x10xi1> to vector<8x10xi32>
    %5 = arith.sitofp %4 : vector<8x10xi32> to vector<8x10xf32>
    %c0_1 = arith.constant 0 : index
    %c0_2 = arith.constant 0 : index
    %6 = vector.load %arg3[%c0_1, %c0_2] : memref<10x128xf32, #tpu.memory_space<vmem>>, vector<10x128xf32>
    %cst = arith.constant dense<0.000000e+00> : vector<8x128xf32>
    %7 = tpu.matmul %5, %6, %cst {dimension_numbers = #tpu.dot_dimension_numbers<[1], [0], [0], [1], [0, 0, 1, 1], [], []>} : vector<8x10xf32>, vector<10x128xf32>, vector<8x128xf32> -> vector<8x128xf32>
    %c0_3 = arith.constant 0 : index
    %c0_4 = arith.constant 0 : index
    %c0_5 = arith.constant 0 : index
    %8 = vector.load %arg1[%c0_3, %c0_4, %c0_5] : memref<2x8x32xf32, #tpu.memory_space<vmem>>, vector<1x8x32xf32>
    %9 = vector.shape_cast %8 : vector<1x8x32xf32> to vector<8x32xf32>
    %c0_6 = arith.constant 0 : index
    %c0_7 = arith.constant 0 : index
    %c0_8 = arith.constant 0 : index
    %10 = vector.load %arg2[%c0_6, %c0_7, %c0_8] : memref<2x8x32xf32, #tpu.memory_space<vmem>>, vector<1x8x32xf32>
    %11 = vector.shape_cast %10 : vector<1x8x32xf32> to vector<8x32xf32>
    %c0_9 = arith.constant 0 : index
    %c0_10 = arith.constant 0 : index
    %12 = vector.load %arg4[%c0_9, %c0_10] : memref<32x128xf32, #tpu.memory_space<vmem>>, vector<32x128xf32>
    %cst_11 = arith.constant dense<0.000000e+00> : vector<8x128xf32>
    %13 = tpu.matmul %9, %12, %cst_11 {dimension_numbers = #tpu.dot_dimension_numbers<[1], [0], [0], [1], [0, 0, 1, 1], [], []>} : vector<8x32xf32>, vector<32x128xf32>, vector<8x128xf32> -> vector<8x128xf32>
    %14 = arith.addf %7, %13 : vector<8x128xf32>
    %c0_12 = arith.constant 0 : index
    %c0_13 = arith.constant 0 : index
    %15 = vector.load %arg5[%c0_12, %c0_13] : memref<1x128xf32, #tpu.memory_space<vmem>>, vector<1x128xf32>
    %16 = vector.broadcast %15 : vector<1x128xf32> to vector<8x128xf32>
    %17 = arith.addf %14, %16 : vector<8x128xf32>
    %18 = arith.negf %17 : vector<8x128xf32>
    %19 = math.exp %18 : vector<8x128xf32>
    %cst_14 = arith.constant 1.000000e+00 : f32
    %20 = vector.broadcast %cst_14 : f32 to vector<8x128xf32>
    %21 = arith.addf %20, %19 : vector<8x128xf32>
    %22 = arith.divf %20, %21 : vector<8x128xf32>
    %23 = math.tanh %17 : vector<8x128xf32>
    %24 = vector.extract_strided_slice %22 {offsets = [0, 0], sizes = [8, 32], strides = [1, 1]} : vector<8x128xf32> to vector<8x32xf32>
    %25 = vector.extract_strided_slice %22 {offsets = [0, 32], sizes = [8, 32], strides = [1, 1]} : vector<8x128xf32> to vector<8x32xf32>
    %26 = vector.extract_strided_slice %23 {offsets = [0, 64], sizes = [8, 32], strides = [1, 1]} : vector<8x128xf32> to vector<8x32xf32>
    %27 = vector.extract_strided_slice %22 {offsets = [0, 96], sizes = [8, 32], strides = [1, 1]} : vector<8x128xf32> to vector<8x32xf32>
    %28 = arith.mulf %25, %11 : vector<8x32xf32>
    %29 = arith.mulf %24, %26 : vector<8x32xf32>
    %30 = arith.addf %28, %29 : vector<8x32xf32>
    %31 = math.tanh %30 : vector<8x32xf32>
    %32 = arith.mulf %27, %31 : vector<8x32xf32>
    %c0_15 = arith.constant 0 : index
    %c0_16 = arith.constant 0 : index
    %c0_17 = arith.constant 0 : index
    %33 = vector.load %arg12[%c0_15, %c0_16, %c0_17] : memref<2x8x32xf32, #tpu.memory_space<vmem>>, vector<1x8x32xf32>
    %34 = vector.shape_cast %33 : vector<1x8x32xf32> to vector<8x32xf32>
    %35 = vector.shape_cast %32 : vector<8x32xf32> to vector<1x8x32xf32>
    tpu.vector_store %arg12[%c0_15, %c0_16, %c0_17], %35 {strides = array<i32>} : memref<2x8x32xf32, #tpu.memory_space<vmem>>, vector<1x8x32xf32>,
    %c0_18 = arith.constant 0 : index
    %c0_19 = arith.constant 0 : index
    %c0_20 = arith.constant 0 : index
    %36 = vector.load %arg13[%c0_18, %c0_19, %c0_20] : memref<2x8x32xf32, #tpu.memory_space<vmem>>, vector<1x8x32xf32>
    %37 = vector.shape_cast %36 : vector<1x8x32xf32> to vector<8x32xf32>
    %38 = vector.shape_cast %30 : vector<8x32xf32> to vector<1x8x32xf32>
    tpu.vector_store %arg13[%c0_18, %c0_19, %c0_20], %38 {strides = array<i32>} : memref<2x8x32xf32, #tpu.memory_space<vmem>>, vector<1x8x32xf32>,
    %c0_21 = arith.constant 0 : index
    %c0_22 = arith.constant 0 : index
    %39 = vector.load %arg6[%c0_21, %c0_22] : memref<32x128xf32, #tpu.memory_space<vmem>>, vector<32x128xf32>
    %cst_23 = arith.constant dense<0.000000e+00> : vector<8x128xf32>
    %40 = tpu.matmul %32, %39, %cst_23 {dimension_numbers = #tpu.dot_dimension_numbers<[1], [0], [0], [1], [0, 0, 1, 1], [], []>} : vector<8x32xf32>, vector<32x128xf32>, vector<8x128xf32> -> vector<8x128xf32>
    %c1 = arith.constant 1 : index
    %c0_24 = arith.constant 0 : index
    %c0_25 = arith.constant 0 : index
    %41 = vector.load %arg1[%c1, %c0_24, %c0_25] : memref<2x8x32xf32, #tpu.memory_space<vmem>>, vector<1x8x32xf32>
    %42 = vector.shape_cast %41 : vector<1x8x32xf32> to vector<8x32xf32>
    %c1_26 = arith.constant 1 : index
    %c0_27 = arith.constant 0 : index
    %c0_28 = arith.constant 0 : index
    %43 = vector.load %arg2[%c1_26, %c0_27, %c0_28] : memref<2x8x32xf32, #tpu.memory_space<vmem>>, vector<1x8x32xf32>
    %44 = vector.shape_cast %43 : vector<1x8x32xf32> to vector<8x32xf32>
    %c0_29 = arith.constant 0 : index
    %c0_30 = arith.constant 0 : index
    %45 = vector.load %arg7[%c0_29, %c0_30] : memref<32x128xf32, #tpu.memory_space<vmem>>, vector<32x128xf32>
    %cst_31 = arith.constant dense<0.000000e+00> : vector<8x128xf32>
    %46 = tpu.matmul %42, %45, %cst_31 {dimension_numbers = #tpu.dot_dimension_numbers<[1], [0], [0], [1], [0, 0, 1, 1], [], []>} : vector<8x32xf32>, vector<32x128xf32>, vector<8x128xf32> -> vector<8x128xf32>
    %47 = arith.addf %40, %46 : vector<8x128xf32>
    %c0_32 = arith.constant 0 : index
    %c0_33 = arith.constant 0 : index
    %48 = vector.load %arg8[%c0_32, %c0_33] : memref<1x128xf32, #tpu.memory_space<vmem>>, vector<1x128xf32>
    %49 = vector.broadcast %48 : vector<1x128xf32> to vector<8x128xf32>
    %50 = arith.addf %47, %49 : vector<8x128xf32>
    %51 = arith.negf %50 : vector<8x128xf32>
    %52 = math.exp %51 : vector<8x128xf32>
    %cst_34 = arith.constant 1.000000e+00 : f32
    %53 = vector.broadcast %cst_34 : f32 to vector<8x128xf32>
    %54 = arith.addf %53, %52 : vector<8x128xf32>
    %55 = arith.divf %53, %54 : vector<8x128xf32>
    %56 = math.tanh %50 : vector<8x128xf32>
    %57 = vector.extract_strided_slice %55 {offsets = [0, 0], sizes = [8, 32], strides = [1, 1]} : vector<8x128xf32> to vector<8x32xf32>
    %58 = vector.extract_strided_slice %55 {offsets = [0, 32], sizes = [8, 32], strides = [1, 1]} : vector<8x128xf32> to vector<8x32xf32>
    %59 = vector.extract_strided_slice %56 {offsets = [0, 64], sizes = [8, 32], strides = [1, 1]} : vector<8x128xf32> to vector<8x32xf32>
    %60 = vector.extract_strided_slice %55 {offsets = [0, 96], sizes = [8, 32], strides = [1, 1]} : vector<8x128xf32> to vector<8x32xf32>
    %61 = arith.mulf %58, %44 : vector<8x32xf32>
    %62 = arith.mulf %57, %59 : vector<8x32xf32>
    %63 = arith.addf %61, %62 : vector<8x32xf32>
    %64 = math.tanh %63 : vector<8x32xf32>
    %65 = arith.mulf %60, %64 : vector<8x32xf32>
    %c1_35 = arith.constant 1 : index
    %c0_36 = arith.constant 0 : index
    %c0_37 = arith.constant 0 : index
    %66 = vector.load %arg12[%c1_35, %c0_36, %c0_37] : memref<2x8x32xf32, #tpu.memory_space<vmem>>, vector<1x8x32xf32>
    %67 = vector.shape_cast %66 : vector<1x8x32xf32> to vector<8x32xf32>
    %68 = vector.shape_cast %65 : vector<8x32xf32> to vector<1x8x32xf32>
    tpu.vector_store %arg12[%c1_35, %c0_36, %c0_37], %68 {strides = array<i32>} : memref<2x8x32xf32, #tpu.memory_space<vmem>>, vector<1x8x32xf32>,
    %c1_38 = arith.constant 1 : index
    %c0_39 = arith.constant 0 : index
    %c0_40 = arith.constant 0 : index
    %69 = vector.load %arg13[%c1_38, %c0_39, %c0_40] : memref<2x8x32xf32, #tpu.memory_space<vmem>>, vector<1x8x32xf32>
    %70 = vector.shape_cast %69 : vector<1x8x32xf32> to vector<8x32xf32>
    %71 = vector.shape_cast %63 : vector<8x32xf32> to vector<1x8x32xf32>
    tpu.vector_store %arg13[%c1_38, %c0_39, %c0_40], %71 {strides = array<i32>} : memref<2x8x32xf32, #tpu.memory_space<vmem>>, vector<1x8x32xf32>,
    %c0_41 = arith.constant 0 : index
    %c0_42 = arith.constant 0 : index
    %72 = vector.load %arg9[%c0_41, %c0_42] : memref<32x128xf32, #tpu.memory_space<vmem>>, vector<32x128xf32>
    %cst_43 = arith.constant dense<0.000000e+00> : vector<8x128xf32>
    %73 = tpu.matmul %65, %72, %cst_43 {dimension_numbers = #tpu.dot_dimension_numbers<[1], [0], [0], [1], [0, 0, 1, 1], [], []>} : vector<8x32xf32>, vector<32x128xf32>, vector<8x128xf32> -> vector<8x128xf32>
    %c0_44 = arith.constant 0 : index
    %c0_45 = arith.constant 0 : index
    %74 = vector.load %arg10[%c0_44, %c0_45] : memref<1x128xf32, #tpu.memory_space<vmem>>, vector<1x128xf32>
    %75 = vector.broadcast %74 : vector<1x128xf32> to vector<8x128xf32>
    %76 = arith.addf %73, %75 : vector<8x128xf32>
    %c0_46 = arith.constant 0 : index
    %c0_47 = arith.constant 0 : index
    %77 = vector.load %arg11[%c0_46, %c0_47] : memref<8x128xf32, #tpu.memory_space<vmem>>, vector<8x128xf32>
    tpu.vector_store %arg11[%c0_46, %c0_47], %76 {strides = array<i32>} : memref<8x128xf32, #tpu.memory_space<vmem>>, vector<8x128xf32>,
    return
  }
}

</mosaic_0001>

<llo_original>
// kernel: decoder_forward.1
$region0: #{decoder_forward.1}
  #allocation0 [shape = 'u32[]', space=smem, size = 0x4, offset = 0x4, fixed_abs, tag = 'smem constant byte address 0x4 - core index']
  #allocation1 [shape = 'u32[144,128]{1,0:T(1,128)}', space=vmem, size = 0x12000, scoped, tag = 'internal scratch']
  %s0 = inlined_call_operand.vmem [shape: s32[8,1], index: 0, kind: input, shape index: {}]
  %s1 = inlined_call_operand.vmem [shape: f32[2,8,32], index: 1, kind: input, shape index: {}]
  %s2 = inlined_call_operand.vmem [shape: f32[2,8,32], index: 2, kind: input, shape index: {}]
  %s3 = inlined_call_operand.hbm [shape: f32[10,128], index: 3, kind: input, shape index: {}]
  %s4 = inlined_call_operand.vmem [shape: f32[32,128], index: 4, kind: input, shape index: {}]
  %s5 = inlined_call_operand.vmem [shape: f32[1,128], index: 5, kind: input, shape index: {}]
  %s6 = inlined_call_operand.vmem [shape: f32[32,128], index: 6, kind: input, shape index: {}]
  %s7 = inlined_call_operand.hbm [shape: f32[32,128], index: 7, kind: input, shape index: {}]
  %s8 = inlined_call_operand.hbm [shape: f32[1,128], index: 8, kind: input, shape index: {}]
  %s9 = inlined_call_operand.hbm [shape: f32[32,128], index: 9, kind: input, shape index: {}]
  %s10 = inlined_call_operand.hbm [shape: f32[1,128], index: 10, kind: input, shape index: {}]
  %s11 = inlined_call_operand.vmem [shape: f32[8,128], index: 11, kind: output, shape index: {0}]
  %s12 = inlined_call_operand.vmem [shape: f32[2,8,32], index: 12, kind: output, shape index: {1}]
  %s13 = inlined_call_operand.vmem [shape: f32[2,8,32], index: 13, kind: output, shape index: {2}]
  %14 = xla_tuple %s11, %s12, %s13
  %s15 = sld [smem:[#allocation0]]
  $region90: #{decoder_forward.1} parent=0
    _
  %s17 = ssub.s32 1, %s15
  %s18 = scalar_select 0, %s17, %s15
  $region1: #{decoder_forward.1} parent=0
    #allocation2 [shape = 'u8[8192]{0}', space=vmem, size = 0x2000, scoped, tag = 'input window, operand 3, single buffered']
    #allocation3 [shape = 's32[1]{0}', space=sflag, size = 0x4, scoped, tag = 'scoped memory for decoder_forward.1']
    #allocation4 [shape = 'u8[16384]{0}', space=vmem, size = 0x4000, scoped, tag = 'input window, operand 7, single buffered']
    #allocation5 [shape = 's32[1]{0}', space=sflag, size = 0x4, scoped, tag = 'scoped memory for decoder_forward.1']
    #allocation6 [shape = 'u8[512]{0}', space=vmem, size = 0x400, scoped, tag = 'input window, operand 8, single buffered']
    #allocation7 [shape = 'u8[16384]{0}', space=vmem, size = 0x4000, scoped, tag = 'input window, operand 9, single buffered']
    #allocation8 [shape = 's32[1]{0}', space=sflag, size = 0x4, scoped, tag = 'scoped memory for decoder_forward.1']
    #allocation9 [shape = 'u8[512]{0}', space=vmem, size = 0x400, scoped, tag = 'input window, operand 10, single buffered']
    %19 = vsyncpa [#allocation3], 0
    %20 = vsyncpa [#allocation5], 0
    %21 = vsyncpa [#allocation8], 0
    // Predicated region
    $region2: #{decoder_forward.1} parent=1 // pred_check
      _
    $region3: #{decoder_forward.1} parent=1 // pred_check_branch
      %23 = sbr.rel (0) target = $region5
    $region4: #{decoder_forward.1} parent=1 // pred_region
      _
    $region5: #{decoder_forward.1} parent=1 // pred_fallthru
      _
    // Predicated region
    $region6: #{decoder_forward.1} parent=1 // pred_check
      _
    $region7: #{decoder_forward.1} parent=1 // pred_check_branch
      %25 = sbr.rel (0) target = $region9
    $region8: #{decoder_forward.1} parent=1 // pred_region
      _
    $region9: #{decoder_forward.1} parent=1 // pred_fallthru
      _
    // Predicated region
    $region10: #{decoder_forward.1} parent=1 // pred_check
      _
    $region11: #{decoder_forward.1} parent=1 // pred_check_branch
      %27 = sbr.rel (0) target = $region13
    $region12: #{decoder_forward.1} parent=1 // pred_region
      _
    $region13: #{decoder_forward.1} parent=1 // pred_fallthru
      _
    // Predicated region
    $region14: #{decoder_forward.1} parent=1 // pred_check
      _
    $region15: #{decoder_forward.1} parent=1 // pred_check_branch
      %29 = sbr.rel (0) target = $region17
    $region16: #{decoder_forward.1} parent=1 // pred_region
      %s31 = ssub.s32 256, 256
      %32 = vsyncadd [#allocation3], %s31
      %s33 = sshll.u32 [#allocation2], 4
      %s34 = int_to_ptr.vmem [resolvable:$true] %s33
      %39 = dma.hbm_to_vmem [thread:$0]  %s3, 256, %s34, [#allocation3], 128, 128, 8
    $region17: #{decoder_forward.1} parent=1 // pred_fallthru
      _
    // Predicated region
    $region18: #{decoder_forward.1} parent=1 // pred_check
      _
    $region19: #{decoder_forward.1} parent=1 // pred_check_branch
      %41 = sbr.rel (0) target = $region21
    $region20: #{decoder_forward.1} parent=1 // pred_region
      _
    $region21: #{decoder_forward.1} parent=1 // pred_fallthru
      _
    // Predicated region
    $region22: #{decoder_forward.1} parent=1 // pred_check
      _
    $region23: #{decoder_forward.1} parent=1 // pred_check_branch
      %43 = sbr.rel (0) target = $region25
    $region24: #{decoder_forward.1} parent=1 // pred_region
      _
    $region25: #{decoder_forward.1} parent=1 // pred_fallthru
      _
    // Predicated region
    $region26: #{decoder_forward.1} parent=1 // pred_check
      _
    $region27: #{decoder_forward.1} parent=1 // pred_check_branch
      %45 = sbr.rel (0) target = $region29
    $region28: #{decoder_forward.1} parent=1 // pred_region
      _
    $region29: #{decoder_forward.1} parent=1 // pred_fallthru
      _
    // Predicated region
    $region30: #{decoder_forward.1} parent=1 // pred_check
      _
    $region31: #{decoder_forward.1} parent=1 // pred_check_branch
      %47 = sbr.rel (0) target = $region33
    $region32: #{decoder_forward.1} parent=1 // pred_region
      %s49 = ssub.s32 512, 512
      %50 = vsyncadd [#allocation5], %s49
      %s51 = sshll.u32 [#allocation4], 4
      %s52 = int_to_ptr.vmem [resolvable:$true] %s51
      %57 = dma.hbm_to_vmem [thread:$0]  %s7, 512, %s52, [#allocation5], 128, 128, 8
    $region33: #{decoder_forward.1} parent=1 // pred_fallthru
      _
    // Predicated region
    $region34: #{decoder_forward.1} parent=1 // pred_check
      _
    $region35: #{decoder_forward.1} parent=1 // pred_check_branch
      %59 = sbr.rel (0) target = $region37
    $region36: #{decoder_forward.1} parent=1 // pred_region
      %s61 = ssub.s32 16, 16
      %62 = vsyncadd [#allocation5], %s61
      %s64 = sshll.u32 [#allocation6], 4
      %s65 = int_to_ptr.vmem [resolvable:$true] %s64
      %67 = dma.hbm_to_vmem [thread:$0]  %s8, 16, %s65, [#allocation5]
    $region37: #{decoder_forward.1} parent=1 // pred_fallthru
      _
    // Predicated region
    $region38: #{decoder_forward.1} parent=1 // pred_check
      _
    $region39: #{decoder_forward.1} parent=1 // pred_check_branch
      %69 = sbr.rel (0) target = $region41
    $region40: #{decoder_forward.1} parent=1 // pred_region
      %s71 = ssub.s32 512, 512
      %72 = vsyncadd [#allocation8], %s71
      %s73 = sshll.u32 [#allocation7], 4
      %s74 = int_to_ptr.vmem [resolvable:$true] %s73
      %79 = dma.hbm_to_vmem [thread:$0]  %s9, 512, %s74, [#allocation8], 128, 128, 8
    $region41: #{decoder_forward.1} parent=1 // pred_fallthru
      _
    // Predicated region
    $region42: #{decoder_forward.1} parent=1 // pred_check
      _
    $region43: #{decoder_forward.1} parent=1 // pred_check_branch
      %81 = sbr.rel (0) target = $region45
    $region44: #{decoder_forward.1} parent=1 // pred_region
      %s83 = ssub.s32 16, 16
      %84 = vsyncadd [#allocation8], %s83
      %s86 = sshll.u32 [#allocation9], 4
      %s87 = int_to_ptr.vmem [resolvable:$true] %s86
      %89 = dma.hbm_to_vmem [thread:$0]  %s10, 16, %s87, [#allocation8]
    $region45: #{decoder_forward.1} parent=1 // pred_fallthru
      _
    // Predicated region
    $region46: #{decoder_forward.1} parent=1 // pred_check
      _
    $region47: #{decoder_forward.1} parent=1 // pred_check_branch
      %91 = sbr.rel (0) target = $region49
    $region48: #{decoder_forward.1} parent=1 // pred_region
      %92 = dma.done [#allocation3], 256
    $region49: #{decoder_forward.1} parent=1 // pred_fallthru
      _
    // Predicated region
    $region50: #{decoder_forward.1} parent=1 // pred_check
      _
    $region51: #{decoder_forward.1} parent=1 // pred_check_branch
      %94 = sbr.rel (0) target = $region53
    $region52: #{decoder_forward.1} parent=1 // pred_region
      %95 = dma.done [#allocation5], 512
    $region53: #{decoder_forward.1} parent=1 // pred_fallthru
      _
    // Predicated region
    $region54: #{decoder_forward.1} parent=1 // pred_check
      _
    $region55: #{decoder_forward.1} parent=1 // pred_check_branch
      %97 = sbr.rel (0) target = $region57
    $region56: #{decoder_forward.1} parent=1 // pred_region
      %98 = dma.done [#allocation5], 16
    $region57: #{decoder_forward.1} parent=1 // pred_fallthru
      _
    // Predicated region
    $region58: #{decoder_forward.1} parent=1 // pred_check
      _
    $region59: #{decoder_forward.1} parent=1 // pred_check_branch
      %100 = sbr.rel (0) target = $region61
    $region60: #{decoder_forward.1} parent=1 // pred_region
      %101 = dma.done [#allocation8], 512
    $region61: #{decoder_forward.1} parent=1 // pred_fallthru
      _
    // Predicated region
    $region62: #{decoder_forward.1} parent=1 // pred_check
      _
    $region63: #{decoder_forward.1} parent=1 // pred_check_branch
      %103 = sbr.rel (0) target = $region65
    $region64: #{decoder_forward.1} parent=1 // pred_region
      %104 = dma.done [#allocation8], 16
    $region65: #{decoder_forward.1} parent=1 // pred_fallthru
      _
    %v105 = vld [vmem:[%s0] sm:$0xff]
    %v106 = vlaneseq
    %v107 = vand.u32 %v106, 127
    %108 = vset.pattern.permute.xlu0 0
    %109 = vperm.xlu0 %108, %v105
    %v110 = vpop.permute.xlu0 %109
    %vm111 = vcmp.eq.s32.totalorder %v107, %v110
    %v112 = vsel %vm111, 1, 0
    %v113 = vcvt.s32.f32 %v112
    %v114 = vld [vmem:[#allocation2] sm:$0xff]
    %v115 = vld [vmem:[#allocation2 + $0x8] sm:$0x3]
    %v116 = vld [vmem:[%s1] sm:$0xff]
    %v117 = vld [vmem:[%s2] sm:$0xff]
    %v118 = vld [vmem:[%s4] sm:$0xff]
    %v119 = vld [vmem:[%s4 + $0x8] sm:$0xff]
    %v120 = vld [vmem:[%s4 + $0x10] sm:$0xff]
    %v121 = vld [vmem:[%s4 + $0x18] sm:$0xff]
    %vm122 = vcmask 261120
    %v124 = vsel %vm122, %v116, 0
    %126 = vmatprep.subr.mxu0 0.0
    %127 = vmatpush1.msra.mxu0 %v118
    %128 = vmatprep.subr.mxu0 0.0
    %129 = vmatpush1.msra.mxu0 %v119
    %130 = vmatprep.subr.mxu0 0.0
    %131 = vmatpush1.msra.mxu0 %v120
    %132 = vmatprep.subr.mxu0 0.0
    %133 = vmatpush1.msra.mxu0 %v121
    %134 = vmatprep.subr.mxu0 0.0
    %135 = vmatpush1.msra.mxu0 0.0
    %136 = vmatprep.subr.mxu0 0.0
    %137 = vmatpush1.msra.mxu0 0.0
    %138 = vmatprep.subr.mxu0 0.0
    %139 = vmatpush1.msra.mxu0 0.0
    %140 = vmatprep.subr.mxu0 0.0
    %141 = vmatpush1.msra.mxu0 0.0
    %142 = vmatprep.subr.mxu0 0.0
    %143 = vmatpush1.msra.mxu0 0.0
    %144 = vmatprep.subr.mxu0 0.0
    %145 = vmatpush1.msra.mxu0 0.0
    %146 = vmatprep.subr.mxu0 0.0
    %147 = vmatpush1.msra.mxu0 0.0
    %148 = vmatprep.subr.mxu0 0.0
    %149 = vmatpush1.msra.mxu0 0.0
    %150 = vmatprep.subr.mxu0 0.0
    %151 = vmatpush1.msra.mxu0 0.0
    %152 = vmatprep.subr.mxu0 0.0
    %153 = vmatpush1.msra.mxu0 0.0
    %154 = vmatprep.subr.mxu0 0.0
    %155 = vmatpush1.msra.mxu0 0.0
    %156 = vmatprep.subr.mxu0 0.0
    %157 = vmatpush1.msra.mxu0 0.0
    %158 = vmatprep.subr.mxu0 0.0
    %159 = vmatpush1.msra.mxu0 0.0
    %160 = vmatprep.subr.mxu0 0.0
    %161 = vmatpush1.msra.mxu0 0.0
    %162 = vmatprep.subr.mxu0 0.0
    %163 = vmatpush1.msra.mxu0 0.0
    %164 = vmatprep.subr.mxu0 0.0
    %165 = vmatpush1.msra.mxu0 0.0
    %166 = vmatprep.subr.mxu0 0.0
    %167 = vmatpush1.msra.mxu0 0.0
    %168 = vmatprep.subr.mxu0 0.0
    %169 = vmatpush1.msra.mxu0 0.0
    %170 = vmatprep.subr.mxu0 0.0
    %171 = vmatpush1.msra.mxu0 0.0
    %172 = vmatprep.subr.mxu0 0.0
    %173 = vmatpush1.msra.mxu0 0.0
    %174 = vmatprep.subr.mxu0 0.0
    %175 = vmatpush1.msra.mxu0 0.0
    %176 = vmatprep.subr.mxu0 0.0
    %177 = vmatpush1.msra.mxu0 0.0
    %178 = vmatprep.subr.mxu0 0.0
    %179 = vmatpush1.msra.mxu0 0.0
    %180 = vmatprep.subr.mxu0 0.0
    %181 = vmatpush1.msra.mxu0 0.0
    %182 = vmatprep.subr.mxu0 0.0
    %183 = vmatpush1.msra.mxu0 0.0
    %184 = vmatprep.subr.mxu0 0.0
    %185 = vmatpush1.msra.mxu0 0.0
    %186 = vmatprep.subr.mxu0 0.0
    %187 = vmatpush1.msra.mxu0 0.0
    %188 = vmatprep.subr.mxu0 0.0
    %189 = vmatpush1.msra.mxu0 0.0
    %190 = vmatprep.mubr.f32.mxu0 0.0
    %191 = vmatmul.mubr.f32.gmra.mrb[0].mxu0 %v124
    %v192 = vpop.f32.mrb[0].mxu0
    %v193 = vadd.f32 0.0, %v192
    %v194 = vpop.f32.mrb[0].mxu0
    %195 = vdwg.mxu0
    %vm196 = vcmask 80896
    %v198 = vsel %vm196, %v113, 0
    %vm200 = vcmask 1041408
    %v202 = vsel %vm200, %v115, 0
    %204 = vmatprep.subr.mxu0 0.0
    %205 = vmatpush1.msra.mxu0 %v114
    %206 = vmatprep.subr.mxu0 0.0
    %207 = vmatpush1.msra.mxu0 %v202
    %208 = vmatprep.subr.mxu0 0.0
    %209 = vmatpush1.msra.mxu0 0.0
    %210 = vmatprep.subr.mxu0 0.0
    %211 = vmatpush1.msra.mxu0 0.0
    %212 = vmatprep.subr.mxu0 0.0
    %213 = vmatpush1.msra.mxu0 0.0
    %214 = vmatprep.subr.mxu0 0.0
    %215 = vmatpush1.msra.mxu0 0.0
    %216 = vmatprep.subr.mxu0 0.0
    %217 = vmatpush1.msra.mxu0 0.0
    %218 = vmatprep.subr.mxu0 0.0
    %219 = vmatpush1.msra.mxu0 0.0
    %220 = vmatprep.subr.mxu0 0.0
    %221 = vmatpush1.msra.mxu0 0.0
    %222 = vmatprep.subr.mxu0 0.0
    %223 = vmatpush1.msra.mxu0 0.0
    %224 = vmatprep.subr.mxu0 0.0
    %225 = vmatpush1.msra.mxu0 0.0
    %226 = vmatprep.subr.mxu0 0.0
    %227 = vmatpush1.msra.mxu0 0.0
    %228 = vmatprep.subr.mxu0 0.0
    %229 = vmatpush1.msra.mxu0 0.0
    %230 = vmatprep.subr.mxu0 0.0
    %231 = vmatpush1.msra.mxu0 0.0
    %232 = vmatprep.subr.mxu0 0.0
    %233 = vmatpush1.msra.mxu0 0.0
    %234 = vmatprep.subr.mxu0 0.0
    %235 = vmatpush1.msra.mxu0 0.0
    %236 = vmatprep.subr.mxu0 0.0
    %237 = vmatpush1.msra.mxu0 0.0
    %238 = vmatprep.subr.mxu0 0.0
    %239 = vmatpush1.msra.mxu0 0.0
    %240 = vmatprep.subr.mxu0 0.0
    %241 = vmatpush1.msra.mxu0 0.0
    %242 = vmatprep.subr.mxu0 0.0
    %243 = vmatpush1.msra.mxu0 0.0
    %244 = vmatprep.subr.mxu0 0.0
    %245 = vmatpush1.msra.mxu0 0.0
    %246 = vmatprep.subr.mxu0 0.0
    %247 = vmatpush1.msra.mxu0 0.0
    %248 = vmatprep.subr.mxu0 0.0
    %249 = vmatpush1.msra.mxu0 0.0
    %250 = vmatprep.subr.mxu0 0.0
    %251 = vmatpush1.msra.mxu0 0.0
    %252 = vmatprep.subr.mxu0 0.0
    %253 = vmatpush1.msra.mxu0 0.0
    %254 = vmatprep.subr.mxu0 0.0
    %255 = vmatpush1.msra.mxu0 0.0
    %256 = vmatprep.subr.mxu0 0.0
    %257 = vmatpush1.msra.mxu0 0.0
    %258 = vmatprep.subr.mxu0 0.0
    %259 = vmatpush1.msra.mxu0 0.0
    %260 = vmatprep.subr.mxu0 0.0
    %261 = vmatpush1.msra.mxu0 0.0
    %262 = vmatprep.subr.mxu0 0.0
    %263 = vmatpush1.msra.mxu0 0.0
    %264 = vmatprep.subr.mxu0 0.0
    %265 = vmatpush1.msra.mxu0 0.0
    %266 = vmatprep.subr.mxu0 0.0
    %267 = vmatpush1.msra.mxu0 0.0
    %268 = vmatprep.mubr.f32.mxu0 0.0
    %269 = vmatmul.mubr.f32.gmra.mrb[0].mxu0 %v198
    %v270 = vpop.f32.mrb[0].mxu0
    %v271 = vadd.f32 %v193, %v270
    %v272 = vpop.f32.mrb[0].mxu0
    %273 = vdwg.mxu0
    %v274 = vld [vmem:[%s5] sm:$0x1]
    %v276 = vlaneseq
    %v277 = vshrl.u32 %v276, 7
    %v278 = vsub.s32 0, %v277
    %v279 = vrot.slane %v274, %v278
    %v281 = vadd.f32 %v271, %v279
    %v282 = vxor.u32 %v281, 2147483648
    %v283 = vmul.f32 %v282, 1.442695
    %v284 = vpow.pop %v283
    %v285 = vadd.f32 %v284, 1.0
    %v286 = vrcp.pop %v285
    %v287 = vmul.f32 1.0, %v286
    %v288 = vtanh.pop %v281
    %290 = vrot.lane.b32.xlu0 %v117, 32
    %v291 = vpop.permute.xlu0 %290
    %v293 = vmul.f32 %v287, %v291
    %295 = vrot.lane.b32.xlu0 %v288, 64
    %v296 = vpop.permute.xlu0 %295
    %v298 = vmul.f32 %v287, %v296
    %300 = vrot.lane.b32.xlu0 %v298, 32
    %v301 = vpop.permute.xlu0 %300
    %v303 = vadd.f32 %v293, %v301
    %v304 = vtanh.pop %v303
    %306 = vrot.lane.b32.xlu0 %v304, 64
    %v307 = vpop.permute.xlu0 %306
    %v309 = vmul.f32 %v287, %v307
    %311 = vrot.lane.b32.xlu0 %v309, 32
    %v312 = vpop.permute.xlu0 %311
    %314 = vst.msk [vmem:[%s12] sm:$0xff] %vm122, %v312
    %316 = vrot.lane.b32.xlu0 %v303, 96
    %v317 = vpop.permute.xlu0 %316
    %319 = vst.msk [vmem:[%s13] sm:$0xff] %vm122, %v317
    %v320 = vld [vmem:[%s6] sm:$0xff]
    %v321 = vld [vmem:[%s6 + $0x8] sm:$0xff]
    %v322 = vld [vmem:[%s6 + $0x10] sm:$0xff]
    %v323 = vld [vmem:[%s6 + $0x18] sm:$0xff]
    %s324 = scalar_lea.vmem %s1, 8
    %v325 = vld [vmem:[%s324] sm:$0xff]
    %s326 = scalar_lea.vmem %s2, 8
    %v327 = vld [vmem:[%s326] sm:$0xff]
    %v328 = vld [vmem:[#allocation4] sm:$0xff]
    %v329 = vld [vmem:[#allocation4 + $0x8] sm:$0xff]
    %v330 = vld [vmem:[#allocation4 + $0x10] sm:$0xff]
    %v331 = vld [vmem:[#allocation4 + $0x18] sm:$0xff]
    %v333 = vsel %vm122, %v325, 0
    %335 = vmatprep.subr.mxu0 0.0
    %336 = vmatpush1.msra.mxu0 %v328
    %337 = vmatprep.subr.mxu0 0.0
    %338 = vmatpush1.msra.mxu0 %v329
    %339 = vmatprep.subr.mxu0 0.0
    %340 = vmatpush1.msra.mxu0 %v330
    %341 = vmatprep.subr.mxu0 0.0
    %342 = vmatpush1.msra.mxu0 %v331
    %343 = vmatprep.subr.mxu0 0.0
    %344 = vmatpush1.msra.mxu0 0.0
    %345 = vmatprep.subr.mxu0 0.0
    %346 = vmatpush1.msra.mxu0 0.0
    %347 = vmatprep.subr.mxu0 0.0
    %348 = vmatpush1.msra.mxu0 0.0
    %349 = vmatprep.subr.mxu0 0.0
    %350 = vmatpush1.msra.mxu0 0.0
    %351 = vmatprep.subr.mxu0 0.0
    %352 = vmatpush1.msra.mxu0 0.0
    %353 = vmatprep.subr.mxu0 0.0
    %354 = vmatpush1.msra.mxu0 0.0
    %355 = vmatprep.subr.mxu0 0.0
    %356 = vmatpush1.msra.mxu0 0.0
    %357 = vmatprep.subr.mxu0 0.0
    %358 = vmatpush1.msra.mxu0 0.0
    %359 = vmatprep.subr.mxu0 0.0
    %360 = vmatpush1.msra.mxu0 0.0
    %361 = vmatprep.subr.mxu0 0.0
    %362 = vmatpush1.msra.mxu0 0.0
    %363 = vmatprep.subr.mxu0 0.0
    %364 = vmatpush1.msra.mxu0 0.0
    %365 = vmatprep.subr.mxu0 0.0
    %366 = vmatpush1.msra.mxu0 0.0
    %367 = vmatprep.subr.mxu0 0.0
    %368 = vmatpush1.msra.mxu0 0.0
    %369 = vmatprep.subr.mxu0 0.0
    %370 = vmatpush1.msra.mxu0 0.0
    %371 = vmatprep.subr.mxu0 0.0
    %372 = vmatpush1.msra.mxu0 0.0
    %373 = vmatprep.subr.mxu0 0.0
    %374 = vmatpush1.msra.mxu0 0.0
    %375 = vmatprep.subr.mxu0 0.0
    %376 = vmatpush1.msra.mxu0 0.0
    %377 = vmatprep.subr.mxu0 0.0
    %378 = vmatpush1.msra.mxu0 0.0
    %379 = vmatprep.subr.mxu0 0.0
    %380 = vmatpush1.msra.mxu0 0.0
    %381 = vmatprep.subr.mxu0 0.0
    %382 = vmatpush1.msra.mxu0 0.0
    %383 = vmatprep.subr.mxu0 0.0
    %384 = vmatpush1.msra.mxu0 0.0
    %385 = vmatprep.subr.mxu0 0.0
    %386 = vmatpush1.msra.mxu0 0.0
    %387 = vmatprep.subr.mxu0 0.0
    %388 = vmatpush1.msra.mxu0 0.0
    %389 = vmatprep.subr.mxu0 0.0
    %390 = vmatpush1.msra.mxu0 0.0
    %391 = vmatprep.subr.mxu0 0.0
    %392 = vmatpush1.msra.mxu0 0.0
    %393 = vmatprep.subr.mxu0 0.0
    %394 = vmatpush1.msra.mxu0 0.0
    %395 = vmatprep.subr.mxu0 0.0
    %396 = vmatpush1.msra.mxu0 0.0
    %397 = vmatprep.subr.mxu0 0.0
    %398 = vmatpush1.msra.mxu0 0.0
    %399 = vmatprep.mubr.f32.mxu0 0.0
    %400 = vmatmul.mubr.f32.gmra.mrb[0].mxu0 %v333
    %v401 = vpop.f32.mrb[0].mxu0
    %v402 = vadd.f32 0.0, %v401
    %v403 = vpop.f32.mrb[0].mxu0
    %404 = vdwg.mxu0
    %v405 = vsel %vm122, %v312, 0
    %407 = vmatprep.subr.mxu0 0.0
    %408 = vmatpush1.msra.mxu0 %v320
    %409 = vmatprep.subr.mxu0 0.0
    %410 = vmatpush1.msra.mxu0 %v321
    %411 = vmatprep.subr.mxu0 0.0
    %412 = vmatpush1.msra.mxu0 %v322
    %413 = vmatprep.subr.mxu0 0.0
    %414 = vmatpush1.msra.mxu0 %v323
    %415 = vmatprep.subr.mxu0 0.0
    %416 = vmatpush1.msra.mxu0 0.0
    %417 = vmatprep.subr.mxu0 0.0
    %418 = vmatpush1.msra.mxu0 0.0
    %419 = vmatprep.subr.mxu0 0.0
    %420 = vmatpush1.msra.mxu0 0.0
    %421 = vmatprep.subr.mxu0 0.0
    %422 = vmatpush1.msra.mxu0 0.0
    %423 = vmatprep.subr.mxu0 0.0
    %424 = vmatpush1.msra.mxu0 0.0
    %425 = vmatprep.subr.mxu0 0.0
    %426 = vmatpush1.msra.mxu0 0.0
    %427 = vmatprep.subr.mxu0 0.0
    %428 = vmatpush1.msra.mxu0 0.0
    %429 = vmatprep.subr.mxu0 0.0
    %430 = vmatpush1.msra.mxu0 0.0
    %431 = vmatprep.subr.mxu0 0.0
    %432 = vmatpush1.msra.mxu0 0.0
    %433 = vmatprep.subr.mxu0 0.0
    %434 = vmatpush1.msra.mxu0 0.0
    %435 = vmatprep.subr.mxu0 0.0
    %436 = vmatpush1.msra.mxu0 0.0
    %437 = vmatprep.subr.mxu0 0.0
    %438 = vmatpush1.msra.mxu0 0.0
    %439 = vmatprep.subr.mxu0 0.0
    %440 = vmatpush1.msra.mxu0 0.0
    %441 = vmatprep.subr.mxu0 0.0
    %442 = vmatpush1.msra.mxu0 0.0
    %443 = vmatprep.subr.mxu0 0.0
    %444 = vmatpush1.msra.mxu0 0.0
    %445 = vmatprep.subr.mxu0 0.0
    %446 = vmatpush1.msra.mxu0 0.0
    %447 = vmatprep.subr.mxu0 0.0
    %448 = vmatpush1.msra.mxu0 0.0
    %449 = vmatprep.subr.mxu0 0.0
    %450 = vmatpush1.msra.mxu0 0.0
    %451 = vmatprep.subr.mxu0 0.0
    %452 = vmatpush1.msra.mxu0 0.0
    %453 = vmatprep.subr.mxu0 0.0
    %454 = vmatpush1.msra.mxu0 0.0
    %455 = vmatprep.subr.mxu0 0.0
    %456 = vmatpush1.msra.mxu0 0.0
    %457 = vmatprep.subr.mxu0 0.0
    %458 = vmatpush1.msra.mxu0 0.0
    %459 = vmatprep.subr.mxu0 0.0
    %460 = vmatpush1.msra.mxu0 0.0
    %461 = vmatprep.subr.mxu0 0.0
    %462 = vmatpush1.msra.mxu0 0.0
    %463 = vmatprep.subr.mxu0 0.0
    %464 = vmatpush1.msra.mxu0 0.0
    %465 = vmatprep.subr.mxu0 0.0
    %466 = vmatpush1.msra.mxu0 0.0
    %467 = vmatprep.subr.mxu0 0.0
    %468 = vmatpush1.msra.mxu0 0.0
    %469 = vmatprep.subr.mxu0 0.0
    %470 = vmatpush1.msra.mxu0 0.0
    %471 = vmatprep.mubr.f32.mxu0 0.0
    %472 = vmatmul.mubr.f32.gmra.mrb[0].mxu0 %v405
    %v473 = vpop.f32.mrb[0].mxu0
    %v474 = vadd.f32 %v402, %v473
    %v475 = vpop.f32.mrb[0].mxu0
    %476 = vdwg.mxu0
    %v477 = vld [vmem:[#allocation6] sm:$0x1]
    %v479 = vlaneseq
    %v480 = vshrl.u32 %v479, 7
    %v481 = vsub.s32 0, %v480
    %v482 = vrot.slane %v477, %v481
    %v484 = vadd.f32 %v474, %v482
    %v485 = vxor.u32 %v484, 2147483648
    %v486 = vmul.f32 %v485, 1.442695
    %v487 = vpow.pop %v486
    %v488 = vadd.f32 %v487, 1.0
    %v489 = vrcp.pop %v488
    %v490 = vmul.f32 1.0, %v489
    %v491 = vtanh.pop %v484
    %493 = vrot.lane.b32.xlu0 %v327, 32
    %v494 = vpop.permute.xlu0 %493
    %v496 = vmul.f32 %v490, %v494
    %498 = vrot.lane.b32.xlu0 %v491, 64
    %v499 = vpop.permute.xlu0 %498
    %v501 = vmul.f32 %v490, %v499
    %503 = vrot.lane.b32.xlu0 %v501, 32
    %v504 = vpop.permute.xlu0 %503
    %v506 = vadd.f32 %v496, %v504
    %v507 = vtanh.pop %v506
    %509 = vrot.lane.b32.xlu0 %v507, 64
    %v510 = vpop.permute.xlu0 %509
    %v512 = vmul.f32 %v490, %v510
    %514 = vrot.lane.b32.xlu0 %v512, 32
    %v515 = vpop.permute.xlu0 %514
    %s517 = scalar_lea.vmem %s12, 8
    %518 = vst.msk [vmem:[%s517] sm:$0xff] %vm122, %v515
    %520 = vrot.lane.b32.xlu0 %v506, 96
    %v521 = vpop.permute.xlu0 %520
    %s523 = scalar_lea.vmem %s13, 8
    %524 = vst.msk [vmem:[%s523] sm:$0xff] %vm122, %v521
    %v525 = vld [vmem:[#allocation7] sm:$0xff]
    %v526 = vld [vmem:[#allocation7 + $0x8] sm:$0xff]
    %v527 = vld [vmem:[#allocation7 + $0x10] sm:$0xff]
    %v528 = vld [vmem:[#allocation7 + $0x18] sm:$0xff]
    %v529 = vld [vmem:[#allocation9] sm:$0x1]
    %v531 = vlaneseq
    %v532 = vshrl.u32 %v531, 7
    %v533 = vsub.s32 0, %v532
    %v534 = vrot.slane %v529, %v533
    %v536 = vsel %vm122, %v515, 0
    %538 = vmatprep.subr.mxu0 0.0
    %539 = vmatpush1.msra.mxu0 %v525
    %540 = vmatprep.subr.mxu0 0.0
    %541 = vmatpush1.msra.mxu0 %v526
    %542 = vmatprep.subr.mxu0 0.0
    %543 = vmatpush1.msra.mxu0 %v527
    %544 = vmatprep.subr.mxu0 0.0
    %545 = vmatpush1.msra.mxu0 %v528
    %546 = vmatprep.subr.mxu0 0.0
    %547 = vmatpush1.msra.mxu0 0.0
    %548 = vmatprep.subr.mxu0 0.0
    %549 = vmatpush1.msra.mxu0 0.0
    %550 = vmatprep.subr.mxu0 0.0
    %551 = vmatpush1.msra.mxu0 0.0
    %552 = vmatprep.subr.mxu0 0.0
    %553 = vmatpush1.msra.mxu0 0.0
    %554 = vmatprep.subr.mxu0 0.0
    %555 = vmatpush1.msra.mxu0 0.0
    %556 = vmatprep.subr.mxu0 0.0
    %557 = vmatpush1.msra.mxu0 0.0
    %558 = vmatprep.subr.mxu0 0.0
    %559 = vmatpush1.msra.mxu0 0.0
    %560 = vmatprep.subr.mxu0 0.0
    %561 = vmatpush1.msra.mxu0 0.0
    %562 = vmatprep.subr.mxu0 0.0
    %563 = vmatpush1.msra.mxu0 0.0
    %564 = vmatprep.subr.mxu0 0.0
    %565 = vmatpush1.msra.mxu0 0.0
    %566 = vmatprep.subr.mxu0 0.0
    %567 = vmatpush1.msra.mxu0 0.0
    %568 = vmatprep.subr.mxu0 0.0
    %569 = vmatpush1.msra.mxu0 0.0
    %570 = vmatprep.subr.mxu0 0.0
    %571 = vmatpush1.msra.mxu0 0.0
    %572 = vmatprep.subr.mxu0 0.0
    %573 = vmatpush1.msra.mxu0 0.0
    %574 = vmatprep.subr.mxu0 0.0
    %575 = vmatpush1.msra.mxu0 0.0
    %576 = vmatprep.subr.mxu0 0.0
    %577 = vmatpush1.msra.mxu0 0.0
    %578 = vmatprep.subr.mxu0 0.0
    %579 = vmatpush1.msra.mxu0 0.0
    %580 = vmatprep.subr.mxu0 0.0
    %581 = vmatpush1.msra.mxu0 0.0
    %582 = vmatprep.subr.mxu0 0.0
    %583 = vmatpush1.msra.mxu0 0.0
    %584 = vmatprep.subr.mxu0 0.0
    %585 = vmatpush1.msra.mxu0 0.0
    %586 = vmatprep.subr.mxu0 0.0
    %587 = vmatpush1.msra.mxu0 0.0
    %588 = vmatprep.subr.mxu0 0.0
    %589 = vmatpush1.msra.mxu0 0.0
    %590 = vmatprep.subr.mxu0 0.0
    %591 = vmatpush1.msra.mxu0 0.0
    %592 = vmatprep.subr.mxu0 0.0
    %593 = vmatpush1.msra.mxu0 0.0
    %594 = vmatprep.subr.mxu0 0.0
    %595 = vmatpush1.msra.mxu0 0.0
    %596 = vmatprep.subr.mxu0 0.0
    %597 = vmatpush1.msra.mxu0 0.0
    %598 = vmatprep.subr.mxu0 0.0
    %599 = vmatpush1.msra.mxu0 0.0
    %600 = vmatprep.subr.mxu0 0.0
    %601 = vmatpush1.msra.mxu0 0.0
    %602 = vmatprep.mubr.f32.mxu0 0.0
    %603 = vmatmul.mubr.f32.gmra.mrb[0].mxu0 %v536
    %v604 = vpop.f32.mrb[0].mxu0
    %v605 = vadd.f32 %v534, %v604
    %v606 = vpop.f32.mrb[0].mxu0
    %607 = vdwg.mxu0
    %608 = vst [vmem:[%s11] sm:$0xff] %v605
    // Predicated region
    $region66: #{decoder_forward.1} parent=1 // pred_check
      _
    $region67: #{decoder_forward.1} parent=1 // pred_check_branch
      %610 = sbr.rel (0) target = $region69
    $region68: #{decoder_forward.1} parent=1 // pred_region
      _
    $region69: #{decoder_forward.1} parent=1 // pred_fallthru
      _
    // Predicated region
    $region70: #{decoder_forward.1} parent=1 // pred_check
      _
    $region71: #{decoder_forward.1} parent=1 // pred_check_branch
      %612 = sbr.rel (0) target = $region73
    $region72: #{decoder_forward.1} parent=1 // pred_region
      _
    $region73: #{decoder_forward.1} parent=1 // pred_fallthru
      _
    // Predicated region
    $region74: #{decoder_forward.1} parent=1 // pred_check
      _
    $region75: #{decoder_forward.1} parent=1 // pred_check_branch
      %614 = sbr.rel (0) target = $region77
    $region76: #{decoder_forward.1} parent=1 // pred_region
      _
    $region77: #{decoder_forward.1} parent=1 // pred_fallthru
      _
    // Predicated region
    $region78: #{decoder_forward.1} parent=1 // pred_check
      _
    $region79: #{decoder_forward.1} parent=1 // pred_check_branch
      %616 = sbr.rel (0) target = $region81
    $region80: #{decoder_forward.1} parent=1 // pred_region
      _
    $region81: #{decoder_forward.1} parent=1 // pred_fallthru
      _
    // Predicated region
    $region82: #{decoder_forward.1} parent=1 // pred_check
      _
    $region83: #{decoder_forward.1} parent=1 // pred_check_branch
      %618 = sbr.rel (0) target = $region85
    $region84: #{decoder_forward.1} parent=1 // pred_region
      _
    $region85: #{decoder_forward.1} parent=1 // pred_fallthru
      _
    // Predicated region
    $region86: #{decoder_forward.1} parent=1 // pred_check
      _
    $region87: #{decoder_forward.1} parent=1 // pred_check_branch
      %620 = sbr.rel (0) target = $region89
    $region88: #{decoder_forward.1} parent=1 // pred_region
      _
    $region89: #{decoder_forward.1} parent=1 // pred_fallthru
      _
    %621 = vsyncpa [#allocation3], 1
    %622 = vsyncpa [#allocation5], 1
    %623 = vsyncpa [#allocation8], 1

</llo_original>
